<compile_context>
chip_gen: v7x
topology: tpu7x:2x2x1
jax: 0.10.0
libtpu: 0.0.40
codegen_flags: <defaults>
</compile_context>

<pallas_src>
import functools

import jax
import jax.numpy as jnp
from jax.experimental import pallas as pl
from jax.experimental.pallas import tpu as pltpu


def _round_up(v, m):
    return ((v + m - 1) // m) * m


def graph_rnn_kernel(x_resident, t, kmap_ref, flag_ref,
                     a_ref, xs_ref, xwx_ref, wn_ref, wfc_ref, bfc_ref,
                     out_ref, acc_ref):
    """Grid = (dst-row tiles i ["parallel"], src-contraction tiles k ["arbitrary"]).

    scalar prefetch (SMEM):
      kmap_ref : [gi, gk] int32  src-tile index remap (block-skip -> no DMA)
      flag_ref : [gi, gk] int32  1 iff adjacency tile (i, k) has any edge
    inputs (VMEM, auto-pipelined):
      a_ref    : [t, t]          int8  adjacency tile A[i-tile, kmap[i,k]-tile]
      xs_ref   : [np, fp]|[t,fp] bf16  src-node features (resident | streamed)
      xwx_ref  : [t, hp]         f32   precomputed x @ Wx + b for the dst tile
      wn_ref   : [fp, hp]        f32   neighbor weight (resident)
      wfc_ref  : [hp, op]        bf16  head weight (resident)
      bfc_ref  : [1, op]         f32   head bias (resident)
    out:
      out_ref  : [t, op]         f32
    scratch:
      acc_ref  : [t, fp]         f32   neighbor-sum accumulator
    """
    i = pl.program_id(0)
    k = pl.program_id(1)

    @pl.when(k == 0)
    def _init():
        acc_ref[...] = jnp.zeros_like(acc_ref)

    # message passing: acc += A[i-tile, k-tile] @ x[k-tile]; skipped (and never
    # DMA'd, thanks to the kmap remap in the index_map) for all-zero A tiles.
    @pl.when(flag_ref[i, k] != 0)
    def _accumulate():
        # int8 -> bf16 upcast in-kernel (A streamed from HBM as int8).
        # Explicit i8 -> f32 -> bf16 chain: individually supported Mosaic
        # converts, fused per-vreg; one [t, t] bf16 operand is materialized.
        a_bf = a_ref[...].astype(jnp.float32).astype(jnp.bfloat16)
        if x_resident:
            start = pl.multiple_of(k * t, 128)
            xs = xs_ref[pl.ds(start, t), :]        # slice the resident src-x
        else:
            xs = xs_ref[...]                        # streamed src-x tile
        acc_ref[...] += jnp.dot(a_bf, xs, preferred_element_type=jnp.float32)

    @pl.when(k == pl.num_programs(1) - 1)
    def _finalize():
        # h = tanh(x @ Wx + b + agg @ Wn); aggregate kept in f32 for accuracy.
        h = jnp.tanh(
            xwx_ref[...]
            + jnp.dot(acc_ref[...], wn_ref[...],
                      preferred_element_type=jnp.float32))          # [t, hp]
        out_ref[...] = (
            jnp.dot(h.astype(jnp.bfloat16), wfc_ref[...],
                    preferred_element_type=jnp.float32)
            + bfc_ref[...]
        ).astype(out_ref.dtype)                                      # [t, op]


def graph_rnn_forward(x, edge_index, params, *, tile=1024, x_resident=None):
    """Glue: build padded int8/bf16 operands, launch tiled kernel, slice result.

    tile: dst-row / src-contraction tile size. 1024 is safe out of the box on
          all generations (v5e default scoped VMEM is 16 MiB); 2048 is a good
          choice on v6e / v7x (int8 A footprint ~14-22 MiB < 32 MiB).
    """
    wx, wn, b, wfc, bfc = (params["wx"], params["wn"], params["b"],
                           params["wfc"], params["bfc"])
    n, f = x.shape
    hdim = wx.shape[1]
    o = wfc.shape[1]

    fp = _round_up(f, 128)
    hp = _round_up(hdim, 128)
    op = _round_up(o, 128)

    np128 = _round_up(n, 128)
    t = min(_round_up(tile, 128), np128)
    # v7x megacore: if the whole graph fits one row tile but splits cleanly in
    # two 128-aligned tiles, split so the "parallel" dst axis can use both TCs.
    if t == np128 and np128 >= 256 and (np128 // 2) % 128 == 0:
        t = np128 // 2
    np_ = _round_up(np128, t)
    gi = gk = np_ // t

    if x_resident is None:
        # keep the whole src-x slab VMEM-resident for moderate graphs
        x_resident = np_ * fp * 2 <= 4 * 1024 * 1024

    # ---- graph-side operands (cacheable across calls for a static graph) ----
    src = edge_index[0].astype(jnp.int32)
    dst = edge_index[1].astype(jnp.int32)
    # dense adjacency built *directly* in int8 (no f32/bf16 N^2 scatter sweep);
    # multi-edge counts exact up to 127.
    a_p = jnp.zeros((np_, np_), jnp.int8).at[dst, src].add(1)
    # per-tile occupancy + "last non-empty src tile" remap for block skipping
    flags = jnp.zeros((gi, gk), jnp.int32).at[dst // t, src // t].max(1)
    last_nz = jnp.where(flags > 0, jnp.arange(gk, dtype=jnp.int32)[None, :], -1)
    kmap = jnp.maximum(jax.lax.cummax(last_nz, axis=1), 0).astype(jnp.int32)

    # ---- node / weight operands ----
    x_src = jnp.zeros((np_, fp), jnp.bfloat16).at[:n, :f].set(
        x.astype(jnp.bfloat16))
    xwx = x @ wx + b[None, :]                                   # [n, hdim] f32
    xwx_p = jnp.zeros((np_, hp), jnp.float32).at[:n, :hdim].set(xwx)
    wn_p = jnp.zeros((fp, hp), jnp.float32).at[:f, :hdim].set(wn)
    wfc_p = jnp.zeros((hp, op), jnp.bfloat16).at[:hdim, :o].set(
        wfc.astype(jnp.bfloat16))
    bfc_p = jnp.zeros((1, op), jnp.float32).at[:, :o].set(bfc[None, :])

    if x_resident:
        xs_spec = pl.BlockSpec((np_, fp), lambda i, k, km, fl: (0, 0))
        xs_bytes = 2 * np_ * fp * 2
    else:
        # same kmap remap as A so skipped tiles never re-DMA x either
        xs_spec = pl.BlockSpec((t, fp), lambda i, k, km, fl: (km[i, k], 0))
        xs_bytes = 2 * t * fp * 2

    # per-step VMEM footprint (double-buffered inputs + conservative in-kernel
    # upcast temporaries) -> scoped-VMEM limit, capped at 32 MiB (safe on
    # v5e / v6e / v7x).
    vmem_needed = (
        2 * t * t * 1            # int8 A tiles (double-buffered)
        + t * t * 6              # i8->f32->bf16 upcast temporaries (worst case)
        + xs_bytes               # src-x (resident slab or streamed tiles)
        + 2 * t * hp * 4         # xwx tiles
        + 2 * t * op * 4         # out tiles
        + t * fp * 4             # f32 aggregation accumulator
        + 2 * (fp * hp * 4 + hp * op * 2 + op * 4))   # resident weights/bias
    vmem_limit = int(min(max(1.25 * vmem_needed + (1 << 20), 16 * 2**20),
                         32 * 2**20))

    cost = pl.CostEstimate(
        flops=2 * np_ * np_ * fp + 2 * np_ * fp * hp + 2 * np_ * hp * op,
        transcendentals=np_ * hp,
        bytes_accessed=(np_ * np_                      # int8 A
                        + np_ * fp * 2                 # bf16 x
                        + np_ * hp * 4                 # f32 x@Wx+b
                        + np_ * op * 4                 # f32 out
                        + fp * hp * 4 + hp * op * 2),
    )

    out_p = pl.pallas_call(
        functools.partial(graph_rnn_kernel, x_resident, t),
        out_shape=jax.ShapeDtypeStruct((np_, op), jnp.float32),
        grid_spec=pltpu.PrefetchScalarGridSpec(
            num_scalar_prefetch=2,                     # kmap, flags -> SMEM
            grid=(gi, gk),
            in_specs=[
                pl.BlockSpec((t, t), lambda i, k, km, fl: (i, km[i, k])),  # A
                xs_spec,                                                   # x (src)
                pl.BlockSpec((t, hp), lambda i, k, km, fl: (i, 0)),        # x@Wx+b
                pl.BlockSpec((fp, hp), lambda i, k, km, fl: (0, 0)),       # Wn
                pl.BlockSpec((hp, op), lambda i, k, km, fl: (0, 0)),       # Wfc
                pl.BlockSpec((1, op), lambda i, k, km, fl: (0, 0)),        # bfc
            ],
            out_specs=pl.BlockSpec((t, op), lambda i, k, km, fl: (i, 0)),
            scratch_shapes=[pltpu.VMEM((t, fp), jnp.float32)],             # acc
        ),
        compiler_params=pltpu.CompilerParams(
            dimension_semantics=("parallel", "arbitrary"),
            vmem_limit_bytes=vmem_limit,
        ),
        cost_estimate=cost,
    )(kmap, flags, a_p, x_src, xwx_p, wn_p, wfc_p, bfc_p)

    # padded node rows hold tanh(b)-derived garbage; the slice removes them.
    return out_p[:n, :o]


def graph_rnn_reference(x, edge_index, params, *, quantize=False):
    """Pure-JAX reference. quantize=True mimics the kernel's bf16 storage casts."""
    n = x.shape[0]
    a = jnp.zeros((n, n), jnp.float32).at[edge_index[1], edge_index[0]].add(1.0)
    q = ((lambda v: v.astype(jnp.bfloat16).astype(jnp.float32))
         if quantize else (lambda v: v))
    agg = a @ q(x)
    h = jnp.tanh(x @ params["wx"] + params["b"] + agg @ params["wn"])
    return q(h) @ q(params["wfc"]) + params["bfc"]


if __name__ == "__main__":
    node_input_dim, rnn_hidden_dim, output_dim = 3, 64, 3

    key = jax.random.PRNGKey(0)
    ks = jax.random.split(key, 8)
    bnd_in = 1.0 / (node_input_dim ** 0.5)
    bnd_h = 1.0 / (rnn_hidden_dim ** 0.5)
    params = {
        "wx": jax.random.uniform(ks[0], (node_input_dim, rnn_hidden_dim),
                                 jnp.float32, -bnd_in, bnd_in),
        "wn": jax.random.uniform(ks[1], (node_input_dim, rnn_hidden_dim),
                                 jnp.float32, -bnd_in, bnd_in),
        "b": jax.random.uniform(ks[2], (rnn_hidden_dim,), jnp.float32,
                                -bnd_in, bnd_in),
        "wfc": jax.random.uniform(ks[3], (rnn_hidden_dim, output_dim),
                                  jnp.float32, -bnd_h, bnd_h),
        "bfc": jax.random.uniform(ks[4], (output_dim,), jnp.float32,
                                  -bnd_h, bnd_h),
    }

    # --- test 1: the 2-node graph from the reference script ------------------
    edge_index = jnp.array([[0, 1], [1, 0]], dtype=jnp.int32)
    node_features = jnp.array([[0.0, 0.0, 0.0], [1.0, 1.0, 1.0]], jnp.float32)

    out = jax.block_until_ready(
        graph_rnn_forward(node_features, edge_index, params))
    assert out.shape == (2, 3)
    ref_q = graph_rnn_reference(node_features, edge_index, params, quantize=True)
    ref_f = graph_rnn_reference(node_features, edge_index, params)
    assert jnp.allclose(out, ref_q, atol=1e-2, rtol=1e-2), (out, ref_q)
    assert jnp.allclose(out, ref_f, atol=8e-2, rtol=8e-2), (out, ref_f)

    # --- test 2: multi-tile sparse graph (N=300, not a multiple of 128) ------
    # src nodes confined to the first 128-tile so several adjacency tiles are
    # all-zero -> exercises k>0 accumulation, pl.when init/finalize, block
    # skipping (kmap remap) and padded-row slicing.
    n2, e2 = 300, 64
    src2 = jax.random.randint(ks[5], (e2,), 0, 120)
    dst2 = jax.random.randint(ks[6], (e2,), 0, n2)
    edge_index2 = jnp.stack([src2, dst2]).astype(jnp.int32)
    x2 = jax.random.normal(ks[7], (n2, node_input_dim), jnp.float32)

    out2 = jax.block_until_ready(
        graph_rnn_forward(x2, edge_index2, params, tile=128))
    assert out2.shape == (n2, output_dim)
    ref2_q = graph_rnn_reference(x2, edge_index2, params, quantize=True)
    ref2_f = graph_rnn_reference(x2, edge_index2, params)
    assert jnp.allclose(out2, ref2_q, atol=1e-2, rtol=1e-2), \
        float(jnp.abs(out2 - ref2_q).max())
    assert jnp.allclose(out2, ref2_f, atol=8e-2, rtol=8e-2), \
        float(jnp.abs(out2 - ref2_f).max())

    # --- test 3: same graph via the streamed (non-resident) src-x path -------
    out2b = jax.block_until_ready(
        graph_rnn_forward(x2, edge_index2, params, tile=128, x_resident=False))
    assert jnp.allclose(out2b, out2, atol=1e-5, rtol=1e-5), \
        float(jnp.abs(out2b - out2).max())

    print("KERNEL_OK")
</pallas_src>

<mosaic_0001>
module attributes {stable_mosaic.version = 11 : i64} {
  func.func @graph_rnn_kernel(%arg0: i32, %arg1: i32, %arg2: memref<1x1xi32, #tpu.memory_space<smem>>, %arg3: memref<1x1xi32, #tpu.memory_space<smem>>, %arg4: memref<128x128xi8, #tpu.memory_space<vmem>>, %arg5: memref<128x128xbf16, #tpu.memory_space<vmem>>, %arg6: memref<128x128xf32, #tpu.memory_space<vmem>>, %arg7: memref<128x128xf32, #tpu.memory_space<vmem>>, %arg8: memref<128x128xbf16, #tpu.memory_space<vmem>>, %arg9: memref<1x128xf32, #tpu.memory_space<vmem>>, %arg10: memref<128x128xf32, #tpu.memory_space<vmem>>, %arg11: memref<128x128xf32, #tpu.memory_space<vmem>>) attributes {dimension_semantics = [#tpu.dimension_semantics<parallel>, #tpu.dimension_semantics<arbitrary>], iteration_bounds = array<i64: 1, 1>, scalar_prefetch = 2 : i64, scratch_operands = 1 : i64, tpu.core_type = #tpu.core_type<tc>, window_params = [{transform_indices = @transform_0, window_bounds = array<i64: 128, 128>}, {pipeline_mode = #tpu.pipeline_mode<synchronous>, transform_indices = @transform_1, window_bounds = array<i64: 128, 128>}, {transform_indices = @transform_2, window_bounds = array<i64: 128, 128>}, {pipeline_mode = #tpu.pipeline_mode<synchronous>, transform_indices = @transform_3, window_bounds = array<i64: 128, 128>}, {pipeline_mode = #tpu.pipeline_mode<synchronous>, transform_indices = @transform_4, window_bounds = array<i64: 128, 128>}, {pipeline_mode = #tpu.pipeline_mode<synchronous>, transform_indices = @transform_5, window_bounds = array<i64: 1, 128>}, {transform_indices = @transform_6, window_bounds = array<i64: 128, 128>}]} {
    %c0_i32 = arith.constant 0 : i32
    %0 = arith.cmpi eq, %arg1, %c0_i32 : i32
    %1 = arith.extui %0 : i1 to i32
    %c0_i32_0 = arith.constant 0 : i32
    %2 = arith.cmpi ne, %1, %c0_i32_0 : i32
    scf.if %2 {
      %cst = arith.constant 0.000000e+00 : f32
      %12 = vector.broadcast %cst : f32 to vector<128x128xf32>
      %c0 = arith.constant 0 : index
      %c0_5 = arith.constant 0 : index
      %13 = vector.load %arg11[%c0, %c0_5] : memref<128x128xf32, #tpu.memory_space<vmem>>, vector<128x128xf32>
      tpu.vector_store %arg11[%c0, %c0_5], %12 {strides = array<i32>} : memref<128x128xf32, #tpu.memory_space<vmem>>, vector<128x128xf32>,
    } else {
    }
    %3 = arith.index_cast %arg0 : i32 to index
    %4 = arith.index_cast %arg1 : i32 to index
    %5 = memref.load %arg3[%3, %4] : memref<1x1xi32, #tpu.memory_space<smem>>
    %c0_i32_1 = arith.constant 0 : i32
    %6 = arith.cmpi ne, %5, %c0_i32_1 : i32
    %7 = arith.extui %6 : i1 to i32
    %c0_i32_2 = arith.constant 0 : i32
    %8 = arith.cmpi ne, %7, %c0_i32_2 : i32
    scf.if %8 {
      %c0 = arith.constant 0 : index
      %c0_5 = arith.constant 0 : index
      %12 = vector.load %arg4[%c0, %c0_5] : memref<128x128xi8, #tpu.memory_space<vmem>>, vector<128x128xi8>
      %13 = arith.sitofp %12 : vector<128x128xi8> to vector<128x128xf32>
      %14 = arith.truncf %13 : vector<128x128xf32> to vector<128x128xbf16>
      %c128_i32 = arith.constant 128 : i32
      %15 = arith.muli %arg1, %c128_i32 : i32
      %16 = tpu.assume_multiple %15, 128 : i32
      %17 = arith.index_cast %16 : i32 to index
      %c0_6 = arith.constant 0 : index
      %18 = vector.load %arg5[%17, %c0_6] : memref<128x128xbf16, #tpu.memory_space<vmem>>, vector<128x128xbf16>
      %c0_7 = arith.constant 0 : index
      %c0_8 = arith.constant 0 : index
      %19 = vector.load %arg11[%c0_7, %c0_8] : memref<128x128xf32, #tpu.memory_space<vmem>>, vector<128x128xf32>
      %cst = arith.constant dense<0.000000e+00> : vector<128x128xf32>
      %20 = tpu.matmul %14, %18, %cst {dimension_numbers = #tpu.dot_dimension_numbers<[1], [0], [0], [1], [0, 0, 1, 1], [], []>} : vector<128x128xbf16>, vector<128x128xbf16>, vector<128x128xf32> -> vector<128x128xf32>
      %21 = arith.addf %19, %20 : vector<128x128xf32>
      %c0_9 = arith.constant 0 : index
      %c0_10 = arith.constant 0 : index
      %22 = vector.load %arg11[%c0_9, %c0_10] : memref<128x128xf32, #tpu.memory_space<vmem>>, vector<128x128xf32>
      tpu.vector_store %arg11[%c0_9, %c0_10], %21 {strides = array<i32>} : memref<128x128xf32, #tpu.memory_space<vmem>>, vector<128x128xf32>,
    } else {
    }
    %c0_i32_3 = arith.constant 0 : i32
    %9 = arith.cmpi eq, %arg1, %c0_i32_3 : i32
    %10 = arith.extui %9 : i1 to i32
    %c0_i32_4 = arith.constant 0 : i32
    %11 = arith.cmpi ne, %10, %c0_i32_4 : i32
    scf.if %11 {
      %c0 = arith.constant 0 : index
      %c0_5 = arith.constant 0 : index
      %12 = vector.load %arg6[%c0, %c0_5] : memref<128x128xf32, #tpu.memory_space<vmem>>, vector<128x128xf32>
      %c0_6 = arith.constant 0 : index
      %c0_7 = arith.constant 0 : index
      %13 = vector.load %arg11[%c0_6, %c0_7] : memref<128x128xf32, #tpu.memory_space<vmem>>, vector<128x128xf32>
      %c0_8 = arith.constant 0 : index
      %c0_9 = arith.constant 0 : index
      %14 = vector.load %arg7[%c0_8, %c0_9] : memref<128x128xf32, #tpu.memory_space<vmem>>, vector<128x128xf32>
      %cst = arith.constant dense<0.000000e+00> : vector<128x128xf32>
      %15 = tpu.matmul %13, %14, %cst {dimension_numbers = #tpu.dot_dimension_numbers<[1], [0], [0], [1], [0, 0, 1, 1], [], []>} : vector<128x128xf32>, vector<128x128xf32>, vector<128x128xf32> -> vector<128x128xf32>
      %16 = arith.addf %12, %15 : vector<128x128xf32>
      %17 = math.tanh %16 : vector<128x128xf32>
      %18 = arith.truncf %17 : vector<128x128xf32> to vector<128x128xbf16>
      %c0_10 = arith.constant 0 : index
      %c0_11 = arith.constant 0 : index
      %19 = vector.load %arg8[%c0_10, %c0_11] : memref<128x128xbf16, #tpu.memory_space<vmem>>, vector<128x128xbf16>
      %cst_12 = arith.constant dense<0.000000e+00> : vector<128x128xf32>
      %20 = tpu.matmul %18, %19, %cst_12 {dimension_numbers = #tpu.dot_dimension_numbers<[1], [0], [0], [1], [0, 0, 1, 1], [], []>} : vector<128x128xbf16>, vector<128x128xbf16>, vector<128x128xf32> -> vector<128x128xf32>
      %c0_13 = arith.constant 0 : index
      %c0_14 = arith.constant 0 : index
      %21 = vector.load %arg9[%c0_13, %c0_14] : memref<1x128xf32, #tpu.memory_space<vmem>>, vector<1x128xf32>
      %22 = vector.broadcast %21 : vector<1x128xf32> to vector<128x128xf32>
      %23 = arith.addf %20, %22 : vector<128x128xf32>
      %c0_15 = arith.constant 0 : index
      %c0_16 = arith.constant 0 : index
      %24 = vector.load %arg10[%c0_15, %c0_16] : memref<128x128xf32, #tpu.memory_space<vmem>>, vector<128x128xf32>
      tpu.vector_store %arg10[%c0_15, %c0_16], %23 {strides = array<i32>} : memref<128x128xf32, #tpu.memory_space<vmem>>, vector<128x128xf32>,
    } else {
    }
    return
  }
  func.func @transform_0(%arg0: i32, %arg1: i32, %arg2: memref<1x1xi32, #tpu.memory_space<smem>>, %arg3: memref<1x1xi32, #tpu.memory_space<smem>>) -> (i32, i32) {
    %0 = arith.index_cast %arg0 : i32 to index
    %1 = arith.index_cast %arg1 : i32 to index
    %2 = memref.load %arg2[%0, %1] : memref<1x1xi32, #tpu.memory_space<smem>>
    %c0_i32 = arith.constant 0 : i32
    return %arg0, %2 : i32, i32
  }
  func.func @transform_1(%arg0: i32, %arg1: i32, %arg2: memref<1x1xi32, #tpu.memory_space<smem>>, %arg3: memref<1x1xi32, #tpu.memory_space<smem>>) -> (i32, i32) {
    %c0_i32 = arith.constant 0 : i32
    %c0_i32_0 = arith.constant 0 : i32
    %c0_i32_1 = arith.constant 0 : i32
    return %c0_i32, %c0_i32_0 : i32, i32
  }
  func.func @transform_2(%arg0: i32, %arg1: i32, %arg2: memref<1x1xi32, #tpu.memory_space<smem>>, %arg3: memref<1x1xi32, #tpu.memory_space<smem>>) -> (i32, i32) {
    %c0_i32 = arith.constant 0 : i32
    %c0_i32_0 = arith.constant 0 : i32
    return %arg0, %c0_i32 : i32, i32
  }
  func.func @transform_3(%arg0: i32, %arg1: i32, %arg2: memref<1x1xi32, #tpu.memory_space<smem>>, %arg3: memref<1x1xi32, #tpu.memory_space<smem>>) -> (i32, i32) {
    %c0_i32 = arith.constant 0 : i32
    %c0_i32_0 = arith.constant 0 : i32
    %c0_i32_1 = arith.constant 0 : i32
    return %c0_i32, %c0_i32_0 : i32, i32
  }
  func.func @transform_4(%arg0: i32, %arg1: i32, %arg2: memref<1x1xi32, #tpu.memory_space<smem>>, %arg3: memref<1x1xi32, #tpu.memory_space<smem>>) -> (i32, i32) {
    %c0_i32 = arith.constant 0 : i32
    %c0_i32_0 = arith.constant 0 : i32
    %c0_i32_1 = arith.constant 0 : i32
    return %c0_i32, %c0_i32_0 : i32, i32
  }
  func.func @transform_5(%arg0: i32, %arg1: i32, %arg2: memref<1x1xi32, #tpu.memory_space<smem>>, %arg3: memref<1x1xi32, #tpu.memory_space<smem>>) -> (i32, i32) {
    %c0_i32 = arith.constant 0 : i32
    %c0_i32_0 = arith.constant 0 : i32
    %c0_i32_1 = arith.constant 0 : i32
    return %c0_i32, %c0_i32_0 : i32, i32
  }
  func.func @transform_6(%arg0: i32, %arg1: i32, %arg2: memref<1x1xi32, #tpu.memory_space<smem>>, %arg3: memref<1x1xi32, #tpu.memory_space<smem>>) -> (i32, i32) {
    %c0_i32 = arith.constant 0 : i32
    %c0_i32_0 = arith.constant 0 : i32
    return %arg0, %c0_i32 : i32, i32
  }
}

</mosaic_0001>

<llo_original>
// kernel: tpu_custom_call.1
$region0: #{tpu_custom_call.1}
  #allocation0 [shape = 'u32[]', space=smem, size = 0x4, offset = 0x4, fixed_abs, tag = 'smem constant byte address 0x4 - core index']
  #allocation1 [shape = 'u32[144,128]{1,0:T(1,128)}', space=vmem, size = 0x12000, scoped, tag = 'internal scratch']
  #allocation2 [shape = 'f32[128,128]{1,0:T(8,128)}', space=vmem, size = 0x10000, scoped, tag = 'scratch operand']
  #allocation3 [shape = 's32[1]{0}', space=sflag, size = 0x4, scoped, tag = 'scoped memory for tpu_custom_call.1']
  #allocation4 [shape = 's32[1,1]{1,0:T(1,128)S(6)}', space=smem, size = 0x200, scoped, tag = 'prefetched SMEM operand 0']
  #allocation5 [shape = 's32[1,1]{1,0:T(1,128)S(6)}', space=smem, size = 0x200, scoped, tag = 'prefetched SMEM operand 1']
  %s0 = inlined_call_operand.<no memory space> [shape: s32[1,1], index: 0, kind: input, shape index: {}]
  %s1 = inlined_call_operand.<no memory space> [shape: s32[1,1], index: 1, kind: input, shape index: {}]
  %s2 = inlined_call_operand.hbm [shape: s8[128,128], index: 2, kind: input, shape index: {}]
  %s3 = inlined_call_operand.hbm [shape: bf16[128,128], index: 3, kind: input, shape index: {}]
  %s4 = inlined_call_operand.hbm [shape: f32[128,128], index: 4, kind: input, shape index: {}]
  %s5 = inlined_call_operand.hbm [shape: f32[128,128], index: 5, kind: input, shape index: {}]
  %s6 = inlined_call_operand.hbm [shape: bf16[128,128], index: 6, kind: input, shape index: {}]
  %s7 = inlined_call_operand.vmem [shape: f32[1,128], index: 7, kind: input, shape index: {}]
  %s8 = inlined_call_operand.hbm [shape: f32[128,128], index: 8, kind: output, shape index: {}]
  %s9 = sld [smem:[#allocation0]]
  $region66: #{tpu_custom_call.1} parent=0
    _
  %s11 = ssub.s32 1, %s9
  %s12 = scalar_select 0, %s11, %s9
  %13 = sst [smem:[#allocation4]] %s0
  %14 = sst [smem:[#allocation5]] %s1
  $region1: #{tpu_custom_call.1} parent=0
    #allocation6 [shape = 'u8[16384]{0}', space=vmem, size = 0x4000, scoped, tag = 'input window, operand 2, single buffered']
    #allocation7 [shape = 's32[1]{0}', space=sflag, size = 0x4, scoped, tag = 'scoped memory for tpu_custom_call.1']
    #allocation8 [shape = 's32[1]{0}', space=sflag, size = 0x4, scoped, tag = 'scoped memory for tpu_custom_call.1']
    #allocation9 [shape = 'u8[32768]{0}', space=vmem, size = 0x8000, scoped, tag = 'input window, operand 3, single buffered']
    #allocation10 [shape = 's32[1]{0}', space=sflag, size = 0x4, scoped, tag = 'scoped memory for tpu_custom_call.1']
    #allocation11 [shape = 'u8[65536]{0}', space=vmem, size = 0x10000, scoped, tag = 'input window, operand 4, single buffered']
    #allocation12 [shape = 'u8[65536]{0}', space=vmem, size = 0x10000, scoped, tag = 'input window, operand 5, single buffered']
    #allocation13 [shape = 's32[1]{0}', space=sflag, size = 0x4, scoped, tag = 'scoped memory for tpu_custom_call.1']
    #allocation14 [shape = 'u8[32768]{0}', space=vmem, size = 0x8000, scoped, tag = 'input window, operand 6, single buffered']
    #allocation15 [shape = 'u8[65536]{0}', space=vmem, size = 0x10000, scoped, tag = 'output window, operand 0, single buffered']
    %15 = vsyncpa [#allocation7], 0
    %16 = vsyncpa [#allocation10], 0
    %17 = vsyncpa [#allocation13], 0
    %18 = vsyncpa [#allocation8], 0
    // Predicated region
    $region2: #{tpu_custom_call.1} parent=1 // pred_check
      _
    $region3: #{tpu_custom_call.1} parent=1 // pred_check_branch
      %20 = sbr.rel (0) target = $region5
    $region4: #{tpu_custom_call.1} parent=1 // pred_region
      %s21 = sadd.s32 0, 0
      %s22 = smul.u32 %s21, 128
      %s23 = sadd.s32 %s22, 0
      %s24 = sld [smem:[#allocation4 + %s23]]
      %s26 = ssub.s32 512, 512
      %27 = vsyncadd [#allocation7], %s26
      %s28 = smul.addr %s24, 128
      %s29 = scalar_lea.hbm %s2, %s28
      %s30 = sshll.u32 [#allocation6], 4
      %s31 = int_to_ptr.vmem [resolvable:$true] %s30
      %36 = dma.hbm_to_vmem [thread:$0]  %s29, 512, %s31, [#allocation7], 128, 128, 8
    $region5: #{tpu_custom_call.1} parent=1 // pred_fallthru
      _
    // Predicated region
    $region6: #{tpu_custom_call.1} parent=1 // pred_check
      _
    $region7: #{tpu_custom_call.1} parent=1 // pred_check_branch
      %38 = sbr.rel (0) target = $region9
    $region8: #{tpu_custom_call.1} parent=1 // pred_region
      %s40 = ssub.s32 1024, 1024
      %41 = vsyncadd [#allocation10], %s40
      %s42 = sshll.u32 [#allocation9], 4
      %s43 = int_to_ptr.vmem [resolvable:$true] %s42
      %48 = dma.hbm_to_vmem [thread:$0]  %s3, 1024, %s43, [#allocation10], 64, 64, 4
    $region9: #{tpu_custom_call.1} parent=1 // pred_fallthru
      _
    // Predicated region
    $region10: #{tpu_custom_call.1} parent=1 // pred_check
      _
    $region11: #{tpu_custom_call.1} parent=1 // pred_check_branch
      %50 = sbr.rel (0) target = $region13
    $region12: #{tpu_custom_call.1} parent=1 // pred_region
      %s52 = ssub.s32 2048, 2048
      %53 = vsyncadd [#allocation10], %s52
      %s54 = sshll.u32 [#allocation11], 4
      %s55 = int_to_ptr.vmem [resolvable:$true] %s54
      %60 = dma.hbm_to_vmem [thread:$0]  %s4, 2048, %s55, [#allocation10], 128, 128, 8
    $region13: #{tpu_custom_call.1} parent=1 // pred_fallthru
      _
    // Predicated region
    $region14: #{tpu_custom_call.1} parent=1 // pred_check
      _
    $region15: #{tpu_custom_call.1} parent=1 // pred_check_branch
      %62 = sbr.rel (0) target = $region17
    $region16: #{tpu_custom_call.1} parent=1 // pred_region
      %s64 = ssub.s32 2048, 2048
      %65 = vsyncadd [#allocation13], %s64
      %s66 = sshll.u32 [#allocation12], 4
      %s67 = int_to_ptr.vmem [resolvable:$true] %s66
      %72 = dma.hbm_to_vmem [thread:$0]  %s5, 2048, %s67, [#allocation13], 128, 128, 8
    $region17: #{tpu_custom_call.1} parent=1 // pred_fallthru
      _
    // Predicated region
    $region18: #{tpu_custom_call.1} parent=1 // pred_check
      _
    $region19: #{tpu_custom_call.1} parent=1 // pred_check_branch
      %74 = sbr.rel (0) target = $region21
    $region20: #{tpu_custom_call.1} parent=1 // pred_region
      %s76 = ssub.s32 1024, 1024
      %77 = vsyncadd [#allocation13], %s76
      %s78 = sshll.u32 [#allocation14], 4
      %s79 = int_to_ptr.vmem [resolvable:$true] %s78
      %84 = dma.hbm_to_vmem [thread:$0]  %s6, 1024, %s79, [#allocation13], 64, 64, 4
    $region21: #{tpu_custom_call.1} parent=1 // pred_fallthru
      _
    // Predicated region
    $region22: #{tpu_custom_call.1} parent=1 // pred_check
      _
    $region23: #{tpu_custom_call.1} parent=1 // pred_check_branch
      %86 = sbr.rel (0) target = $region25
    $region24: #{tpu_custom_call.1} parent=1 // pred_region
      _
    $region25: #{tpu_custom_call.1} parent=1 // pred_fallthru
      _
    // Predicated region
    $region26: #{tpu_custom_call.1} parent=1 // pred_check
      _
    $region27: #{tpu_custom_call.1} parent=1 // pred_check_branch
      %88 = sbr.rel (0) target = $region29
    $region28: #{tpu_custom_call.1} parent=1 // pred_region
      %89 = dma.done [#allocation7], 512
    $region29: #{tpu_custom_call.1} parent=1 // pred_fallthru
      _
    // Predicated region
    $region30: #{tpu_custom_call.1} parent=1 // pred_check
      _
    $region31: #{tpu_custom_call.1} parent=1 // pred_check_branch
      %91 = sbr.rel (0) target = $region33
    $region32: #{tpu_custom_call.1} parent=1 // pred_region
      %92 = dma.done [#allocation10], 1024
    $region33: #{tpu_custom_call.1} parent=1 // pred_fallthru
      _
    // Predicated region
    $region34: #{tpu_custom_call.1} parent=1 // pred_check
      _
    $region35: #{tpu_custom_call.1} parent=1 // pred_check_branch
      %94 = sbr.rel (0) target = $region37
    $region36: #{tpu_custom_call.1} parent=1 // pred_region
      %95 = dma.done [#allocation10], 2048
    $region37: #{tpu_custom_call.1} parent=1 // pred_fallthru
      _
    // Predicated region
    $region38: #{tpu_custom_call.1} parent=1 // pred_check
      _
    $region39: #{tpu_custom_call.1} parent=1 // pred_check_branch
      %97 = sbr.rel (0) target = $region41
    $region40: #{tpu_custom_call.1} parent=1 // pred_region
      %98 = dma.done [#allocation13], 2048
    $region41: #{tpu_custom_call.1} parent=1 // pred_fallthru
      _
    // Predicated region
    $region42: #{tpu_custom_call.1} parent=1 // pred_check
      _
    $region43: #{tpu_custom_call.1} parent=1 // pred_check_branch
      %100 = sbr.rel (0) target = $region45
    $region44: #{tpu_custom_call.1} parent=1 // pred_region
      %101 = dma.done [#allocation13], 1024
    $region45: #{tpu_custom_call.1} parent=1 // pred_fallthru
      _
    %s102 = sadd.s32 0, 0
    %s103 = smul.u32 %s102, 128
    %s104 = sadd.s32 %s103, 0
    %s105 = sld [smem:[#allocation4 + %s104]]
    %p107 = scmp.eq.s32.totalorder 0, 0
    // Predicated region
    $region46: #{tpu_custom_call.1} parent=1 // pred_check
      %p108 = pneg %p107
    $region47: #{tpu_custom_call.1} parent=1 // pred_check_branch
      %110 = sbr.rel (%p108) target = $region49
    $region48: #{tpu_custom_call.1} parent=1 // pred_region
      %111 = vst [vmem:[#allocation2] sm:$0xff] 0.0
      %112 = vst [vmem:[#allocation2 + $0x8] sm:$0xff] 0.0
      %113 = vst [vmem:[#allocation2 + $0x10] sm:$0xff] 0.0
      %114 = vst [vmem:[#allocation2 + $0x18] sm:$0xff] 0.0
      %115 = vst [vmem:[#allocation2 + $0x20] sm:$0xff] 0.0
      %116 = vst [vmem:[#allocation2 + $0x28] sm:$0xff] 0.0
      %117 = vst [vmem:[#allocation2 + $0x30] sm:$0xff] 0.0
      %118 = vst [vmem:[#allocation2 + $0x38] sm:$0xff] 0.0
      %119 = vst [vmem:[#allocation2 + $0x40] sm:$0xff] 0.0
      %120 = vst [vmem:[#allocation2 + $0x48] sm:$0xff] 0.0
      %121 = vst [vmem:[#allocation2 + $0x50] sm:$0xff] 0.0
      %122 = vst [vmem:[#allocation2 + $0x58] sm:$0xff] 0.0
      %123 = vst [vmem:[#allocation2 + $0x60] sm:$0xff] 0.0
      %124 = vst [vmem:[#allocation2 + $0x68] sm:$0xff] 0.0
      %125 = vst [vmem:[#allocation2 + $0x70] sm:$0xff] 0.0
      %126 = vst [vmem:[#allocation2 + $0x78] sm:$0xff] 0.0
    $region49: #{tpu_custom_call.1} parent=1 // pred_fallthru
      _
    %s127 = sadd.s32 0, 0
    %s128 = smul.u32 %s127, 128
    %s129 = sadd.s32 %s128, 0
    %s130 = sld [smem:[#allocation5 + %s129]]
    %p131 = scmp.ne.s32.totalorder %s130, 0
    // Predicated region
    $region50: #{tpu_custom_call.1} parent=1 // pred_check
      %p132 = pneg %p131
    $region51: #{tpu_custom_call.1} parent=1 // pred_check_branch
      %134 = sbr.rel (%p132) target = $region53
    $region52: #{tpu_custom_call.1} parent=1 // pred_region
      %v135 = vld [vmem:[#allocation6] sm:$0xff]
      %v136 = vld [vmem:[#allocation6 + $0x8] sm:$0xff]
      %v137 = vld [vmem:[#allocation6 + $0x10] sm:$0xff]
      %v138 = vld [vmem:[#allocation6 + $0x18] sm:$0xff]
      %v139 = vunpack.c.l.s8.bf16 %v135
      %v140 = vunpack.c.h.s8.bf16 %v135
      %v141 = vunpack.c.l.s8.bf16 %v136
      %v142 = vunpack.c.h.s8.bf16 %v136
      %v143 = vunpack.c.l.s8.bf16 %v137
      %v144 = vunpack.c.h.s8.bf16 %v137
      %v145 = vunpack.c.l.s8.bf16 %v138
      %v146 = vunpack.c.h.s8.bf16 %v138
      %s147 = smul.u32 0, 128
      %s148 = sshra.s32 %s147, 3
      %s149 = sand.u32 %s147, 7
      %s150 = smul.addr %s148, 4
      %s151 = scalar_lea.vmem [#allocation9], %s150
      %v152 = vld [vmem:[%s151] sm:$0xf]
      %v153 = vld [vmem:[%s151 + $0x4] sm:$0xf]
      %v154 = vld [vmem:[%s151 + $0x8] sm:$0xf]
      %v155 = vld [vmem:[%s151 + $0xc] sm:$0xf]
      %v156 = vld [vmem:[%s151 + $0x10] sm:$0xf]
      %v157 = vld [vmem:[%s151 + $0x14] sm:$0xf]
      %v158 = vld [vmem:[%s151 + $0x18] sm:$0xf]
      %v159 = vld [vmem:[%s151 + $0x1c] sm:$0xf]
      %v160 = vld [vmem:[%s151 + $0x20] sm:$0xf]
      %v161 = vld [vmem:[%s151 + $0x24] sm:$0xf]
      %v162 = vld [vmem:[%s151 + $0x28] sm:$0xf]
      %v163 = vld [vmem:[%s151 + $0x2c] sm:$0xf]
      %v164 = vld [vmem:[%s151 + $0x30] sm:$0xf]
      %v165 = vld [vmem:[%s151 + $0x34] sm:$0xf]
      %v166 = vld [vmem:[%s151 + $0x38] sm:$0xf]
      %v167 = vld [vmem:[%s151 + $0x3c] sm:$0xf]
      %v168 = vld [vmem:[#allocation2] sm:$0xff]
      %v169 = vld [vmem:[#allocation2 + $0x8] sm:$0xff]
      %v170 = vld [vmem:[#allocation2 + $0x10] sm:$0xff]
      %v171 = vld [vmem:[#allocation2 + $0x18] sm:$0xff]
      %v172 = vld [vmem:[#allocation2 + $0x20] sm:$0xff]
      %v173 = vld [vmem:[#allocation2 + $0x28] sm:$0xff]
      %v174 = vld [vmem:[#allocation2 + $0x30] sm:$0xff]
      %v175 = vld [vmem:[#allocation2 + $0x38] sm:$0xff]
      %v176 = vld [vmem:[#allocation2 + $0x40] sm:$0xff]
      %v177 = vld [vmem:[#allocation2 + $0x48] sm:$0xff]
      %v178 = vld [vmem:[#allocation2 + $0x50] sm:$0xff]
      %v179 = vld [vmem:[#allocation2 + $0x58] sm:$0xff]
      %v180 = vld [vmem:[#allocation2 + $0x60] sm:$0xff]
      %v181 = vld [vmem:[#allocation2 + $0x68] sm:$0xff]
      %v182 = vld [vmem:[#allocation2 + $0x70] sm:$0xff]
      %v183 = vld [vmem:[#allocation2 + $0x78] sm:$0xff]
      %v200 = vunpack.c.l.b16 %v152
      %v201 = vunpack.c.l.b16 %v153
      %v202 = vunpack.c.l.b16 %v154
      %v203 = vunpack.c.l.b16 %v155
      %v204 = vunpack.c.l.b16 %v156
      %v205 = vunpack.c.l.b16 %v157
      %v206 = vunpack.c.l.b16 %v158
      %v207 = vunpack.c.l.b16 %v159
      %v208 = vunpack.c.l.b16 %v160
      %v209 = vunpack.c.l.b16 %v161
      %v210 = vunpack.c.l.b16 %v162
      %v211 = vunpack.c.l.b16 %v163
      %v212 = vunpack.c.l.b16 %v164
      %v213 = vunpack.c.l.b16 %v165
      %v214 = vunpack.c.l.b16 %v166
      %v215 = vunpack.c.l.b16 %v167
      %v216 = vpack.c.b16 %v201, %v200
      %v217 = vpack.c.b16 %v203, %v202
      %v218 = vpack.c.b16 %v205, %v204
      %v219 = vpack.c.b16 %v207, %v206
      %v220 = vpack.c.b16 %v209, %v208
      %v221 = vpack.c.b16 %v211, %v210
      %v222 = vpack.c.b16 %v213, %v212
      %v223 = vpack.c.b16 %v215, %v214
      %232 = vmatprep.subr.bf16.mxu0 0
      %233 = vmatpush1.bf16.msra.mxu0 %v216
      %234 = vmatprep.subr.bf16.mxu0 0
      %235 = vmatpush1.bf16.msra.mxu0 %v217
      %236 = vmatprep.subr.bf16.mxu0 0
      %237 = vmatpush1.bf16.msra.mxu0 %v218
      %238 = vmatprep.subr.bf16.mxu0 0
      %239 = vmatpush1.bf16.msra.mxu0 %v219
      %240 = vmatprep.subr.bf16.mxu0 0
      %241 = vmatpush1.bf16.msra.mxu0 %v220
      %242 = vmatprep.subr.bf16.mxu0 0
      %243 = vmatpush1.bf16.msra.mxu0 %v221
      %244 = vmatprep.subr.bf16.mxu0 0
      %245 = vmatpush1.bf16.msra.mxu0 %v222
      %246 = vmatprep.subr.bf16.mxu0 0
      %247 = vmatpush1.bf16.msra.mxu0 %v223
      %248 = vmatprep.subr.bf16.mxu0 0
      %249 = vmatpush1.bf16.msra.mxu0 0
      %250 = vmatprep.subr.bf16.mxu0 0
      %251 = vmatpush1.bf16.msra.mxu0 0
      %252 = vmatprep.subr.bf16.mxu0 0
      %253 = vmatpush1.bf16.msra.mxu0 0
      %254 = vmatprep.subr.bf16.mxu0 0
      %255 = vmatpush1.bf16.msra.mxu0 0
      %256 = vmatprep.subr.bf16.mxu0 0
      %257 = vmatpush1.bf16.msra.mxu0 0
      %258 = vmatprep.subr.bf16.mxu0 0
      %259 = vmatpush1.bf16.msra.mxu0 0
      %260 = vmatprep.subr.bf16.mxu0 0
      %261 = vmatpush1.bf16.msra.mxu0 0
      %262 = vmatprep.subr.bf16.mxu0 0
      %263 = vmatpush1.bf16.msra.mxu0 0
      %264 = vmatprep.mubr.bf16.mxu0 0
      %265 = vmatmul.mubr.bf16.gmra.mrb[0].mxu0 %v139
      %v266 = vpop.f32.mrb[0].mxu0
      %v267 = vadd.f32 0.0, %v266
      %v268 = vpop.f32.mrb[0].mxu0
      %v269 = vpop.f32.mrb[0].mxu0
      %v270 = vadd.f32 0.0, %v269
      %v271 = vpop.f32.mrb[0].mxu0
      %272 = vmatprep.mubr.bf16.mxu0 0
      %273 = vmatmul.mubr.bf16.gmra.mrb[0].mxu0 %v140
      %v274 = vpop.f32.mrb[0].mxu0
      %v275 = vadd.f32 0.0, %v274
      %v276 = vpop.f32.mrb[0].mxu0
      %v277 = vpop.f32.mrb[0].mxu0
      %v278 = vadd.f32 0.0, %v277
      %v279 = vpop.f32.mrb[0].mxu0
      %280 = vmatprep.mubr.bf16.mxu0 0
      %281 = vmatmul.mubr.bf16.gmra.mrb[0].mxu0 %v141
      %v282 = vpop.f32.mrb[0].mxu0
      %v283 = vadd.f32 0.0, %v282
      %v284 = vpop.f32.mrb[0].mxu0
      %v285 = vpop.f32.mrb[0].mxu0
      %v286 = vadd.f32 0.0, %v285
      %v287 = vpop.f32.mrb[0].mxu0
      %288 = vmatprep.mubr.bf16.mxu0 0
      %289 = vmatmul.mubr.bf16.gmra.mrb[0].mxu0 %v142
      %v290 = vpop.f32.mrb[0].mxu0
      %v291 = vadd.f32 0.0, %v290
      %v292 = vpop.f32.mrb[0].mxu0
      %v293 = vpop.f32.mrb[0].mxu0
      %v294 = vadd.f32 0.0, %v293
      %v295 = vpop.f32.mrb[0].mxu0
      %296 = vmatprep.mubr.bf16.mxu0 0
      %297 = vmatmul.mubr.bf16.gmra.mrb[0].mxu0 %v143
      %v298 = vpop.f32.mrb[0].mxu0
      %v299 = vadd.f32 0.0, %v298
      %v300 = vpop.f32.mrb[0].mxu0
      %v301 = vpop.f32.mrb[0].mxu0
      %v302 = vadd.f32 0.0, %v301
      %v303 = vpop.f32.mrb[0].mxu0
      %304 = vmatprep.mubr.bf16.mxu0 0
      %305 = vmatmul.mubr.bf16.gmra.mrb[0].mxu0 %v144
      %v306 = vpop.f32.mrb[0].mxu0
      %v307 = vadd.f32 0.0, %v306
      %v308 = vpop.f32.mrb[0].mxu0
      %v309 = vpop.f32.mrb[0].mxu0
      %v310 = vadd.f32 0.0, %v309
      %v311 = vpop.f32.mrb[0].mxu0
      %312 = vmatprep.mubr.bf16.mxu0 0
      %313 = vmatmul.mubr.bf16.gmra.mrb[0].mxu0 %v145
      %v314 = vpop.f32.mrb[0].mxu0
      %v315 = vadd.f32 0.0, %v314
      %v316 = vpop.f32.mrb[0].mxu0
      %v317 = vpop.f32.mrb[0].mxu0
      %v318 = vadd.f32 0.0, %v317
      %v319 = vpop.f32.mrb[0].mxu0
      %320 = vmatprep.mubr.bf16.mxu0 0
      %321 = vmatmul.mubr.bf16.gmra.mrb[0].mxu0 %v146
      %v322 = vpop.f32.mrb[0].mxu0
      %v323 = vadd.f32 0.0, %v322
      %v324 = vpop.f32.mrb[0].mxu0
      %v325 = vpop.f32.mrb[0].mxu0
      %v326 = vadd.f32 0.0, %v325
      %v327 = vpop.f32.mrb[0].mxu0
      %328 = vdwg.mxu0
      %v329 = vadd.f32 %v168, %v267
      %v330 = vadd.f32 %v169, %v270
      %v331 = vadd.f32 %v170, %v275
      %v332 = vadd.f32 %v171, %v278
      %v333 = vadd.f32 %v172, %v283
      %v334 = vadd.f32 %v173, %v286
      %v335 = vadd.f32 %v174, %v291
      %v336 = vadd.f32 %v175, %v294
      %v337 = vadd.f32 %v176, %v299
      %v338 = vadd.f32 %v177, %v302
      %v339 = vadd.f32 %v178, %v307
      %v340 = vadd.f32 %v179, %v310
      %v341 = vadd.f32 %v180, %v315
      %v342 = vadd.f32 %v181, %v318
      %v343 = vadd.f32 %v182, %v323
      %v344 = vadd.f32 %v183, %v326
      %345 = vst [vmem:[#allocation2] sm:$0xff] %v329
      %346 = vst [vmem:[#allocation2 + $0x8] sm:$0xff] %v330
      %347 = vst [vmem:[#allocation2 + $0x10] sm:$0xff] %v331
      %348 = vst [vmem:[#allocation2 + $0x18] sm:$0xff] %v332
      %349 = vst [vmem:[#allocation2 + $0x20] sm:$0xff] %v333
      %350 = vst [vmem:[#allocation2 + $0x28] sm:$0xff] %v334
      %351 = vst [vmem:[#allocation2 + $0x30] sm:$0xff] %v335
      %352 = vst [vmem:[#allocation2 + $0x38] sm:$0xff] %v336
      %353 = vst [vmem:[#allocation2 + $0x40] sm:$0xff] %v337
      %354 = vst [vmem:[#allocation2 + $0x48] sm:$0xff] %v338
      %355 = vst [vmem:[#allocation2 + $0x50] sm:$0xff] %v339
      %356 = vst [vmem:[#allocation2 + $0x58] sm:$0xff] %v340
      %357 = vst [vmem:[#allocation2 + $0x60] sm:$0xff] %v341
      %358 = vst [vmem:[#allocation2 + $0x68] sm:$0xff] %v342
      %359 = vst [vmem:[#allocation2 + $0x70] sm:$0xff] %v343
      %360 = vst [vmem:[#allocation2 + $0x78] sm:$0xff] %v344
    $region53: #{tpu_custom_call.1} parent=1 // pred_fallthru
      _
    // Predicated region
    $region54: #{tpu_custom_call.1} parent=1 // pred_check
      %p361 = pneg %p107
    $region55: #{tpu_custom_call.1} parent=1 // pred_check_branch
      %363 = sbr.rel (%p361) target = $region57
    $region56: #{tpu_custom_call.1} parent=1 // pred_region
      %v364 = vld [vmem:[#allocation11] sm:$0xff]
      %v365 = vld [vmem:[#allocation11 + $0x8] sm:$0xff]
      %v366 = vld [vmem:[#allocation11 + $0x10] sm:$0xff]
      %v367 = vld [vmem:[#allocation11 + $0x18] sm:$0xff]
      %v368 = vld [vmem:[#allocation11 + $0x20] sm:$0xff]
      %v369 = vld [vmem:[#allocation11 + $0x28] sm:$0xff]
      %v370 = vld [vmem:[#allocation11 + $0x30] sm:$0xff]
      %v371 = vld [vmem:[#allocation11 + $0x38] sm:$0xff]
      %v372 = vld [vmem:[#allocation11 + $0x40] sm:$0xff]
      %v373 = vld [vmem:[#allocation11 + $0x48] sm:$0xff]
      %v374 = vld [vmem:[#allocation11 + $0x50] sm:$0xff]
      %v375 = vld [vmem:[#allocation11 + $0x58] sm:$0xff]
      %v376 = vld [vmem:[#allocation11 + $0x60] sm:$0xff]
      %v377 = vld [vmem:[#allocation11 + $0x68] sm:$0xff]
      %v378 = vld [vmem:[#allocation11 + $0x70] sm:$0xff]
      %v379 = vld [vmem:[#allocation11 + $0x78] sm:$0xff]
      %v380 = vld [vmem:[#allocation2] sm:$0xff]
      %v381 = vld [vmem:[#allocation2 + $0x8] sm:$0xff]
      %v382 = vld [vmem:[#allocation2 + $0x10] sm:$0xff]
      %v383 = vld [vmem:[#allocation2 + $0x18] sm:$0xff]
      %v384 = vld [vmem:[#allocation2 + $0x20] sm:$0xff]
      %v385 = vld [vmem:[#allocation2 + $0x28] sm:$0xff]
      %v386 = vld [vmem:[#allocation2 + $0x30] sm:$0xff]
      %v387 = vld [vmem:[#allocation2 + $0x38] sm:$0xff]
      %v388 = vld [vmem:[#allocation2 + $0x40] sm:$0xff]
      %v389 = vld [vmem:[#allocation2 + $0x48] sm:$0xff]
      %v390 = vld [vmem:[#allocation2 + $0x50] sm:$0xff]
      %v391 = vld [vmem:[#allocation2 + $0x58] sm:$0xff]
      %v392 = vld [vmem:[#allocation2 + $0x60] sm:$0xff]
      %v393 = vld [vmem:[#allocation2 + $0x68] sm:$0xff]
      %v394 = vld [vmem:[#allocation2 + $0x70] sm:$0xff]
      %v395 = vld [vmem:[#allocation2 + $0x78] sm:$0xff]
      %v396 = vld [vmem:[#allocation12] sm:$0xff]
      %v397 = vld [vmem:[#allocation12 + $0x8] sm:$0xff]
      %v398 = vld [vmem:[#allocation12 + $0x10] sm:$0xff]
      %v399 = vld [vmem:[#allocation12 + $0x18] sm:$0xff]
      %v400 = vld [vmem:[#allocation12 + $0x20] sm:$0xff]
      %v401 = vld [vmem:[#allocation12 + $0x28] sm:$0xff]
      %v402 = vld [vmem:[#allocation12 + $0x30] sm:$0xff]
      %v403 = vld [vmem:[#allocation12 + $0x38] sm:$0xff]
      %v404 = vld [vmem:[#allocation12 + $0x40] sm:$0xff]
      %v405 = vld [vmem:[#allocation12 + $0x48] sm:$0xff]
      %v406 = vld [vmem:[#allocation12 + $0x50] sm:$0xff]
      %v407 = vld [vmem:[#allocation12 + $0x58] sm:$0xff]
      %v408 = vld [vmem:[#allocation12 + $0x60] sm:$0xff]
      %v409 = vld [vmem:[#allocation12 + $0x68] sm:$0xff]
      %v410 = vld [vmem:[#allocation12 + $0x70] sm:$0xff]
      %v411 = vld [vmem:[#allocation12 + $0x78] sm:$0xff]
      %412 = vmatprep.subr.mxu0 0.0
      %413 = vmatpush1.msra.mxu0 %v396
      %414 = vmatprep.subr.mxu0 0.0
      %415 = vmatpush1.msra.mxu0 %v397
      %416 = vmatprep.subr.mxu0 0.0
      %417 = vmatpush1.msra.mxu0 %v398
      %418 = vmatprep.subr.mxu0 0.0
      %419 = vmatpush1.msra.mxu0 %v399
      %420 = vmatprep.subr.mxu0 0.0
      %421 = vmatpush1.msra.mxu0 %v400
      %422 = vmatprep.subr.mxu0 0.0
      %423 = vmatpush1.msra.mxu0 %v401
      %424 = vmatprep.subr.mxu0 0.0
      %425 = vmatpush1.msra.mxu0 %v402
      %426 = vmatprep.subr.mxu0 0.0
      %427 = vmatpush1.msra.mxu0 %v403
      %428 = vmatprep.subr.mxu0 0.0
      %429 = vmatpush1.msra.mxu0 %v404
      %430 = vmatprep.subr.mxu0 0.0
      %431 = vmatpush1.msra.mxu0 %v405
      %432 = vmatprep.subr.mxu0 0.0
      %433 = vmatpush1.msra.mxu0 %v406
      %434 = vmatprep.subr.mxu0 0.0
      %435 = vmatpush1.msra.mxu0 %v407
      %436 = vmatprep.subr.mxu0 0.0
      %437 = vmatpush1.msra.mxu0 %v408
      %438 = vmatprep.subr.mxu0 0.0
      %439 = vmatpush1.msra.mxu0 %v409
      %440 = vmatprep.subr.mxu0 0.0
      %441 = vmatpush1.msra.mxu0 %v410
      %442 = vmatprep.subr.mxu0 0.0
      %443 = vmatpush1.msra.mxu0 %v411
      %444 = vmatprep.subr.mxu0 0.0
      %445 = vmatpush1.msra.mxu0 0.0
      %446 = vmatprep.subr.mxu0 0.0
      %447 = vmatpush1.msra.mxu0 0.0
      %448 = vmatprep.subr.mxu0 0.0
      %449 = vmatpush1.msra.mxu0 0.0
      %450 = vmatprep.subr.mxu0 0.0
      %451 = vmatpush1.msra.mxu0 0.0
      %452 = vmatprep.subr.mxu0 0.0
      %453 = vmatpush1.msra.mxu0 0.0
      %454 = vmatprep.subr.mxu0 0.0
      %455 = vmatpush1.msra.mxu0 0.0
      %456 = vmatprep.subr.mxu0 0.0
      %457 = vmatpush1.msra.mxu0 0.0
      %458 = vmatprep.subr.mxu0 0.0
      %459 = vmatpush1.msra.mxu0 0.0
      %460 = vmatprep.subr.mxu0 0.0
      %461 = vmatpush1.msra.mxu0 0.0
      %462 = vmatprep.subr.mxu0 0.0
      %463 = vmatpush1.msra.mxu0 0.0
      %464 = vmatprep.subr.mxu0 0.0
      %465 = vmatpush1.msra.mxu0 0.0
      %466 = vmatprep.subr.mxu0 0.0
      %467 = vmatpush1.msra.mxu0 0.0
      %468 = vmatprep.subr.mxu0 0.0
      %469 = vmatpush1.msra.mxu0 0.0
      %470 = vmatprep.subr.mxu0 0.0
      %471 = vmatpush1.msra.mxu0 0.0
      %472 = vmatprep.subr.mxu0 0.0
      %473 = vmatpush1.msra.mxu0 0.0
      %474 = vmatprep.subr.mxu0 0.0
      %475 = vmatpush1.msra.mxu0 0.0
      %476 = vmatprep.mubr.f32.mxu0 0.0
      %477 = vmatmul.mubr.f32.gmra.mrb[0].mxu0 %v380
      %v478 = vpop.f32.mrb[0].mxu0
      %v479 = vadd.f32 0.0, %v478
      %v480 = vpop.f32.mrb[0].mxu0
      %481 = vmatprep.mubr.f32.mxu0 0.0
      %482 = vmatmul.mubr.f32.gmra.mrb[0].mxu0 %v381
      %v483 = vpop.f32.mrb[0].mxu0
      %v484 = vadd.f32 0.0, %v483
      %v485 = vpop.f32.mrb[0].mxu0
      %486 = vmatprep.mubr.f32.mxu0 0.0
      %487 = vmatmul.mubr.f32.gmra.mrb[0].mxu0 %v382
      %v488 = vpop.f32.mrb[0].mxu0
      %v489 = vadd.f32 0.0, %v488
      %v490 = vpop.f32.mrb[0].mxu0
      %491 = vmatprep.mubr.f32.mxu0 0.0
      %492 = vmatmul.mubr.f32.gmra.mrb[0].mxu0 %v383
      %v493 = vpop.f32.mrb[0].mxu0
      %v494 = vadd.f32 0.0, %v493
      %v495 = vpop.f32.mrb[0].mxu0
      %496 = vmatprep.mubr.f32.mxu0 0.0
      %497 = vmatmul.mubr.f32.gmra.mrb[0].mxu0 %v384
      %v498 = vpop.f32.mrb[0].mxu0
      %v499 = vadd.f32 0.0, %v498
      %v500 = vpop.f32.mrb[0].mxu0
      %501 = vmatprep.mubr.f32.mxu0 0.0
      %502 = vmatmul.mubr.f32.gmra.mrb[0].mxu0 %v385
      %v503 = vpop.f32.mrb[0].mxu0
      %v504 = vadd.f32 0.0, %v503
      %v505 = vpop.f32.mrb[0].mxu0
      %506 = vmatprep.mubr.f32.mxu0 0.0
      %507 = vmatmul.mubr.f32.gmra.mrb[0].mxu0 %v386
      %v508 = vpop.f32.mrb[0].mxu0
      %v509 = vadd.f32 0.0, %v508
      %v510 = vpop.f32.mrb[0].mxu0
      %511 = vmatprep.mubr.f32.mxu0 0.0
      %512 = vmatmul.mubr.f32.gmra.mrb[0].mxu0 %v387
      %v513 = vpop.f32.mrb[0].mxu0
      %v514 = vadd.f32 0.0, %v513
      %v515 = vpop.f32.mrb[0].mxu0
      %516 = vmatprep.mubr.f32.mxu0 0.0
      %517 = vmatmul.mubr.f32.gmra.mrb[0].mxu0 %v388
      %v518 = vpop.f32.mrb[0].mxu0
      %v519 = vadd.f32 0.0, %v518
      %v520 = vpop.f32.mrb[0].mxu0
      %521 = vmatprep.mubr.f32.mxu0 0.0
      %522 = vmatmul.mubr.f32.gmra.mrb[0].mxu0 %v389
      %v523 = vpop.f32.mrb[0].mxu0
      %v524 = vadd.f32 0.0, %v523
      %v525 = vpop.f32.mrb[0].mxu0
      %526 = vmatprep.mubr.f32.mxu0 0.0
      %527 = vmatmul.mubr.f32.gmra.mrb[0].mxu0 %v390
      %v528 = vpop.f32.mrb[0].mxu0
      %v529 = vadd.f32 0.0, %v528
      %v530 = vpop.f32.mrb[0].mxu0
      %531 = vmatprep.mubr.f32.mxu0 0.0
      %532 = vmatmul.mubr.f32.gmra.mrb[0].mxu0 %v391
      %v533 = vpop.f32.mrb[0].mxu0
      %v534 = vadd.f32 0.0, %v533
      %v535 = vpop.f32.mrb[0].mxu0
      %536 = vmatprep.mubr.f32.mxu0 0.0
      %537 = vmatmul.mubr.f32.gmra.mrb[0].mxu0 %v392
      %v538 = vpop.f32.mrb[0].mxu0
      %v539 = vadd.f32 0.0, %v538
      %v540 = vpop.f32.mrb[0].mxu0
      %541 = vmatprep.mubr.f32.mxu0 0.0
      %542 = vmatmul.mubr.f32.gmra.mrb[0].mxu0 %v393
      %v543 = vpop.f32.mrb[0].mxu0
      %v544 = vadd.f32 0.0, %v543
      %v545 = vpop.f32.mrb[0].mxu0
      %546 = vmatprep.mubr.f32.mxu0 0.0
      %547 = vmatmul.mubr.f32.gmra.mrb[0].mxu0 %v394
      %v548 = vpop.f32.mrb[0].mxu0
      %v549 = vadd.f32 0.0, %v548
      %v550 = vpop.f32.mrb[0].mxu0
      %551 = vmatprep.mubr.f32.mxu0 0.0
      %552 = vmatmul.mubr.f32.gmra.mrb[0].mxu0 %v395
      %v553 = vpop.f32.mrb[0].mxu0
      %v554 = vadd.f32 0.0, %v553
      %v555 = vpop.f32.mrb[0].mxu0
      %556 = vdwg.mxu0
      %v557 = vadd.f32 %v364, %v479
      %v558 = vadd.f32 %v365, %v484
      %v559 = vadd.f32 %v366, %v489
      %v560 = vadd.f32 %v367, %v494
      %v561 = vadd.f32 %v368, %v499
      %v562 = vadd.f32 %v369, %v504
      %v563 = vadd.f32 %v370, %v509
      %v564 = vadd.f32 %v371, %v514
      %v565 = vadd.f32 %v372, %v519
      %v566 = vadd.f32 %v373, %v524
      %v567 = vadd.f32 %v374, %v529
      %v568 = vadd.f32 %v375, %v534
      %v569 = vadd.f32 %v376, %v539
      %v570 = vadd.f32 %v377, %v544
      %v571 = vadd.f32 %v378, %v549
      %v572 = vadd.f32 %v379, %v554
      %v573 = vtanh.pop %v557
      %v574 = vtanh.pop %v558
      %v575 = vtanh.pop %v559
      %v576 = vtanh.pop %v560
      %v577 = vtanh.pop %v561
      %v578 = vtanh.pop %v562
      %v579 = vtanh.pop %v563
      %v580 = vtanh.pop %v564
      %v581 = vtanh.pop %v565
      %v582 = vtanh.pop %v566
      %v583 = vtanh.pop %v567
      %v584 = vtanh.pop %v568
      %v585 = vtanh.pop %v569
      %v586 = vtanh.pop %v570
      %v587 = vtanh.pop %v571
      %v588 = vtanh.pop %v572
      %v589 = vpack.c.bf16 %v574, %v573
      %v590 = vpack.c.bf16 %v576, %v575
      %v591 = vpack.c.bf16 %v578, %v577
      %v592 = vpack.c.bf16 %v580, %v579
      %v593 = vpack.c.bf16 %v582, %v581
      %v594 = vpack.c.bf16 %v584, %v583
      %v595 = vpack.c.bf16 %v586, %v585
      %v596 = vpack.c.bf16 %v588, %v587
      %v597 = vld [vmem:[#allocation14] sm:$0xf]
      %v598 = vld [vmem:[#allocation14 + $0x4] sm:$0xf]
      %v599 = vld [vmem:[#allocation14 + $0x8] sm:$0xf]
      %v600 = vld [vmem:[#allocation14 + $0xc] sm:$0xf]
      %v601 = vld [vmem:[#allocation14 + $0x10] sm:$0xf]
      %v602 = vld [vmem:[#allocation14 + $0x14] sm:$0xf]
      %v603 = vld [vmem:[#allocation14 + $0x18] sm:$0xf]
      %v604 = vld [vmem:[#allocation14 + $0x1c] sm:$0xf]
      %v605 = vld [vmem:[#allocation14 + $0x20] sm:$0xf]
      %v606 = vld [vmem:[#allocation14 + $0x24] sm:$0xf]
      %v607 = vld [vmem:[#allocation14 + $0x28] sm:$0xf]
      %v608 = vld [vmem:[#allocation14 + $0x2c] sm:$0xf]
      %v609 = vld [vmem:[#allocation14 + $0x30] sm:$0xf]
      %v610 = vld [vmem:[#allocation14 + $0x34] sm:$0xf]
      %v611 = vld [vmem:[#allocation14 + $0x38] sm:$0xf]
      %v612 = vld [vmem:[#allocation14 + $0x3c] sm:$0xf]
      %v613 = vld [vmem:[%s7] sm:$0x1]
      %v615 = vlaneseq
      %v616 = vshrl.u32 %v615, 7
      %v617 = vsub.s32 0, %v616
      %v618 = vrot.slane %v613, %v617
      %v636 = vunpack.c.l.b16 %v597
      %v637 = vunpack.c.l.b16 %v598
      %v638 = vunpack.c.l.b16 %v599
      %v639 = vunpack.c.l.b16 %v600
      %v640 = vunpack.c.l.b16 %v601
      %v641 = vunpack.c.l.b16 %v602
      %v642 = vunpack.c.l.b16 %v603
      %v643 = vunpack.c.l.b16 %v604
      %v644 = vunpack.c.l.b16 %v605
      %v645 = vunpack.c.l.b16 %v606
      %v646 = vunpack.c.l.b16 %v607
      %v647 = vunpack.c.l.b16 %v608
      %v648 = vunpack.c.l.b16 %v609
      %v649 = vunpack.c.l.b16 %v610
      %v650 = vunpack.c.l.b16 %v611
      %v651 = vunpack.c.l.b16 %v612
      %v652 = vpack.c.b16 %v637, %v636
      %v653 = vpack.c.b16 %v639, %v638
      %v654 = vpack.c.b16 %v641, %v640
      %v655 = vpack.c.b16 %v643, %v642
      %v656 = vpack.c.b16 %v645, %v644
      %v657 = vpack.c.b16 %v647, %v646
      %v658 = vpack.c.b16 %v649, %v648
      %v659 = vpack.c.b16 %v651, %v650
      %668 = vmatprep.subr.bf16.mxu0 0
      %669 = vmatpush1.bf16.msra.mxu0 %v652
      %670 = vmatprep.subr.bf16.mxu0 0
      %671 = vmatpush1.bf16.msra.mxu0 %v653
      %672 = vmatprep.subr.bf16.mxu0 0
      %673 = vmatpush1.bf16.msra.mxu0 %v654
      %674 = vmatprep.subr.bf16.mxu0 0
      %675 = vmatpush1.bf16.msra.mxu0 %v655
      %676 = vmatprep.subr.bf16.mxu0 0
      %677 = vmatpush1.bf16.msra.mxu0 %v656
      %678 = vmatprep.subr.bf16.mxu0 0
      %679 = vmatpush1.bf16.msra.mxu0 %v657
      %680 = vmatprep.subr.bf16.mxu0 0
      %681 = vmatpush1.bf16.msra.mxu0 %v658
      %682 = vmatprep.subr.bf16.mxu0 0
      %683 = vmatpush1.bf16.msra.mxu0 %v659
      %684 = vmatprep.subr.bf16.mxu0 0
      %685 = vmatpush1.bf16.msra.mxu0 0
      %686 = vmatprep.subr.bf16.mxu0 0
      %687 = vmatpush1.bf16.msra.mxu0 0
      %688 = vmatprep.subr.bf16.mxu0 0
      %689 = vmatpush1.bf16.msra.mxu0 0
      %690 = vmatprep.subr.bf16.mxu0 0
      %691 = vmatpush1.bf16.msra.mxu0 0
      %692 = vmatprep.subr.bf16.mxu0 0
      %693 = vmatpush1.bf16.msra.mxu0 0
      %694 = vmatprep.subr.bf16.mxu0 0
      %695 = vmatpush1.bf16.msra.mxu0 0
      %696 = vmatprep.subr.bf16.mxu0 0
      %697 = vmatpush1.bf16.msra.mxu0 0
      %698 = vmatprep.subr.bf16.mxu0 0
      %699 = vmatpush1.bf16.msra.mxu0 0
      %700 = vmatprep.mubr.bf16.mxu0 0
      %701 = vmatmul.mubr.bf16.gmra.mrb[0].mxu0 %v589
      %v702 = vpop.f32.mrb[0].mxu0
      %v703 = vadd.f32 %v618, %v702
      %v704 = vpop.f32.mrb[0].mxu0
      %v705 = vpop.f32.mrb[0].mxu0
      %v706 = vadd.f32 %v618, %v705
      %v707 = vpop.f32.mrb[0].mxu0
      %708 = vmatprep.mubr.bf16.mxu0 0
      %709 = vmatmul.mubr.bf16.gmra.mrb[0].mxu0 %v590
      %v710 = vpop.f32.mrb[0].mxu0
      %v711 = vadd.f32 %v618, %v710
      %v712 = vpop.f32.mrb[0].mxu0
      %v713 = vpop.f32.mrb[0].mxu0
      %v714 = vadd.f32 %v618, %v713
      %v715 = vpop.f32.mrb[0].mxu0
      %716 = vmatprep.mubr.bf16.mxu0 0
      %717 = vmatmul.mubr.bf16.gmra.mrb[0].mxu0 %v591
      %v718 = vpop.f32.mrb[0].mxu0
      %v719 = vadd.f32 %v618, %v718
      %v720 = vpop.f32.mrb[0].mxu0
      %v721 = vpop.f32.mrb[0].mxu0
      %v722 = vadd.f32 %v618, %v721
      %v723 = vpop.f32.mrb[0].mxu0
      %724 = vmatprep.mubr.bf16.mxu0 0
      %725 = vmatmul.mubr.bf16.gmra.mrb[0].mxu0 %v592
      %v726 = vpop.f32.mrb[0].mxu0
      %v727 = vadd.f32 %v618, %v726
      %v728 = vpop.f32.mrb[0].mxu0
      %v729 = vpop.f32.mrb[0].mxu0
      %v730 = vadd.f32 %v618, %v729
      %v731 = vpop.f32.mrb[0].mxu0
      %732 = vmatprep.mubr.bf16.mxu0 0
      %733 = vmatmul.mubr.bf16.gmra.mrb[0].mxu0 %v593
      %v734 = vpop.f32.mrb[0].mxu0
      %v735 = vadd.f32 %v618, %v734
      %v736 = vpop.f32.mrb[0].mxu0
      %v737 = vpop.f32.mrb[0].mxu0
      %v738 = vadd.f32 %v618, %v737
      %v739 = vpop.f32.mrb[0].mxu0
      %740 = vmatprep.mubr.bf16.mxu0 0
      %741 = vmatmul.mubr.bf16.gmra.mrb[0].mxu0 %v594
      %v742 = vpop.f32.mrb[0].mxu0
      %v743 = vadd.f32 %v618, %v742
      %v744 = vpop.f32.mrb[0].mxu0
      %v745 = vpop.f32.mrb[0].mxu0
      %v746 = vadd.f32 %v618, %v745
      %v747 = vpop.f32.mrb[0].mxu0
      %748 = vmatprep.mubr.bf16.mxu0 0
      %749 = vmatmul.mubr.bf16.gmra.mrb[0].mxu0 %v595
      %v750 = vpop.f32.mrb[0].mxu0
      %v751 = vadd.f32 %v618, %v750
      %v752 = vpop.f32.mrb[0].mxu0
      %v753 = vpop.f32.mrb[0].mxu0
      %v754 = vadd.f32 %v618, %v753
      %v755 = vpop.f32.mrb[0].mxu0
      %756 = vmatprep.mubr.bf16.mxu0 0
      %757 = vmatmul.mubr.bf16.gmra.mrb[0].mxu0 %v596
      %v758 = vpop.f32.mrb[0].mxu0
      %v759 = vadd.f32 %v618, %v758
      %v760 = vpop.f32.mrb[0].mxu0
      %v761 = vpop.f32.mrb[0].mxu0
      %v762 = vadd.f32 %v618, %v761
      %v763 = vpop.f32.mrb[0].mxu0
      %764 = vdwg.mxu0
      %765 = vst [vmem:[#allocation15] sm:$0xff] %v703
      %766 = vst [vmem:[#allocation15 + $0x8] sm:$0xff] %v706
      %767 = vst [vmem:[#allocation15 + $0x10] sm:$0xff] %v711
      %768 = vst [vmem:[#allocation15 + $0x18] sm:$0xff] %v714
      %769 = vst [vmem:[#allocation15 + $0x20] sm:$0xff] %v719
      %770 = vst [vmem:[#allocation15 + $0x28] sm:$0xff] %v722
      %771 = vst [vmem:[#allocation15 + $0x30] sm:$0xff] %v727
      %772 = vst [vmem:[#allocation15 + $0x38] sm:$0xff] %v730
      %773 = vst [vmem:[#allocation15 + $0x40] sm:$0xff] %v735
      %774 = vst [vmem:[#allocation15 + $0x48] sm:$0xff] %v738
      %775 = vst [vmem:[#allocation15 + $0x50] sm:$0xff] %v743
      %776 = vst [vmem:[#allocation15 + $0x58] sm:$0xff] %v746
      %777 = vst [vmem:[#allocation15 + $0x60] sm:$0xff] %v751
      %778 = vst [vmem:[#allocation15 + $0x68] sm:$0xff] %v754
      %779 = vst [vmem:[#allocation15 + $0x70] sm:$0xff] %v759
      %780 = vst [vmem:[#allocation15 + $0x78] sm:$0xff] %v762
    $region57: #{tpu_custom_call.1} parent=1 // pred_fallthru
      _
    // Predicated region
    $region58: #{tpu_custom_call.1} parent=1 // pred_check
      _
    $region59: #{tpu_custom_call.1} parent=1 // pred_check_branch
      %782 = sbr.rel (0) target = $region61
    $region60: #{tpu_custom_call.1} parent=1 // pred_region
      %s784 = ssub.s32 2048, 2048
      %785 = vsyncadd [#allocation8], %s784
      %s786 = sshll.u32 [#allocation15], 4
      %s787 = int_to_ptr.vmem [resolvable:$true] %s786
      %792 = dma.vmem_to_hbm [thread:$0]  %s787, 2048, %s8, [#allocation8], 128, 128, 8
    $region61: #{tpu_custom_call.1} parent=1 // pred_fallthru
      _
    // Predicated region
    $region62: #{tpu_custom_call.1} parent=1 // pred_check
      _
    $region63: #{tpu_custom_call.1} parent=1 // pred_check_branch
      %794 = sbr.rel (0) target = $region65
    $region64: #{tpu_custom_call.1} parent=1 // pred_region
      %795 = dma.done [#allocation8], 2048
    $region65: #{tpu_custom_call.1} parent=1 // pred_fallthru
      _
    %796 = vsyncpa [#allocation7], 1
    %797 = vsyncpa [#allocation10], 1
    %798 = vsyncpa [#allocation13], 1
    %799 = vsyncpa [#allocation8], 1

</llo_original>
